<compile_context>
chip_gen: v6e
topology: v6e:2x2x1
jax: 0.10.0
libtpu: 0.0.40
codegen_flags: <defaults>
</compile_context>

<pallas_src>
import functools

import jax
import jax.numpy as jnp
from jax import lax
from jax.experimental import pallas as pl
from jax.experimental.pallas import tpu as pltpu


# ----------------------------------------------------------------------------
# Kernel: one MXU matmul  W_packed (k*k*Cout, Cin) @ X (Cin, Hs*W)  + bias
# ----------------------------------------------------------------------------
def _deconv_kernel(x_ref, w_ref, b_ref, out_ref):
    # x_ref  : (1, Cin, Ms)     compute dtype (bf16), Ms = Hs*W pixels (lanes)
    # w_ref  : (k*k*Cout, Cin)  packed transposed-conv weights, compute dtype
    # b_ref  : (k*k*Cout, 1)    f32 bias per (ky, kx, co) row (= bias[co])
    # out_ref: (1, k*k*Cout, Ms)  x.dtype
    y = jnp.dot(w_ref[...], x_ref[0], preferred_element_type=jnp.float32)
    out_ref[0] = (y + b_ref[...]).astype(out_ref.dtype)


# ----------------------------------------------------------------------------
# Generation-aware VMEM capacity (v7x: 64 MiB is the smallest, use as fallback)
# ----------------------------------------------------------------------------
@functools.lru_cache(maxsize=None)
def _vmem_capacity_bytes():
    try:
        info = pltpu.get_tpu_info()
        for attr in ("vmem_capacity_bytes", "vmem_bytes", "vmem_size_bytes"):
            v = getattr(info, attr, None)
            if v:
                return int(v)
    except Exception:
        pass
    return 64 * 1024 * 1024


def _pick_h_strip(N, H, W, row_bytes, budget_bytes):
    """Largest divisor Hs of H whose double-buffered x/out blocks fit the VMEM
    budget, preferring lane-aligned strips ((Hs*W) % 128 == 0) and a grid that
    keeps >= 2 steps so both v7x TensorCores get work."""
    divisors = sorted((d for d in range(1, H + 1) if H % d == 0), reverse=True)
    for need_lane in (True, False):
        for need_multi_step in (True, False):
            for hs in divisors:
                if hs * row_bytes > budget_bytes:
                    continue
                if need_lane and (hs * W) % 128 != 0:
                    continue
                if need_multi_step and N * (H // hs) < 2:
                    continue
                return hs
    return 1


# ----------------------------------------------------------------------------
# Wrapper: PyTorch-compatible ConvTranspose2d (padding=0, output_padding=0,
# dilation=1, groups=1) for the kernel_size == stride case.
# ----------------------------------------------------------------------------
@functools.partial(jax.jit, static_argnames=("stride", "compute_dtype"))
def conv_transpose2d(x_nchw, weight, bias, *, stride,
                     compute_dtype=jnp.bfloat16):
    N, Cin, H, W = x_nchw.shape
    w_cin, Cout, kh, kw = weight.shape
    assert w_cin == Cin and kh == kw, "unexpected weight shape"
    k = kh
    assert stride == k, "only kernel_size == stride is implemented"

    Ho = (H - 1) * stride + k          # == H * k
    Wo = (W - 1) * stride + k          # == W * k
    kkC = k * k * Cout
    out_dtype = x_nchw.dtype

    # ---- operand packing (free reshape / tiny XLA ops) ----------------------
    x_flat = x_nchw.reshape(N, Cin, H * W).astype(compute_dtype)
    # W_packed[(ky*k + kx)*Cout + co, ci] = weight[ci, co, ky, kx]
    w_packed = (jnp.transpose(weight, (2, 3, 1, 0))
                .reshape(kkC, Cin).astype(compute_dtype))
    b_packed = jnp.tile(bias.astype(jnp.float32), k * k).reshape(kkC, 1)

    # ---- VMEM-aware tiling: largest H-strip that fits -----------------------
    cbytes = jnp.dtype(compute_dtype).itemsize
    obytes = jnp.dtype(out_dtype).itemsize
    const_bytes = kkC * Cin * cbytes + kkC * 4          # 1x weights + bias
    row_bytes = 2 * W * (Cin * cbytes + kkC * obytes)   # 2x-buffered x/out rows
    vmem_cap = _vmem_capacity_bytes()
    budget = int(0.6 * vmem_cap) - const_bytes
    Hs = _pick_h_strip(N, H, W, row_bytes, budget)
    Ms = Hs * W
    grid = (N, H // Hs)

    needed = const_bytes + Hs * row_bytes
    vmem_limit = int(min(0.9 * vmem_cap, max(needed + (8 << 20), 32 << 20)))

    cost = pl.CostEstimate(
        flops=2 * N * kkC * Cin * H * W,
        transcendentals=0,
        bytes_accessed=(N * Cin * H * W * cbytes          # x
                        + kkC * Cin * cbytes + kkC * 4    # weights + bias
                        + N * kkC * H * W * obytes))      # output

    y = pl.pallas_call(
        _deconv_kernel,
        out_shape=jax.ShapeDtypeStruct((N, kkC, H * W), out_dtype),
        grid=grid,
        in_specs=[
            pl.BlockSpec((1, Cin, Ms), lambda n, h: (n, 0, h)),
            pl.BlockSpec((kkC, Cin), lambda n, h: (0, 0),
                         pipeline_mode=pl.Buffered(1)),
            pl.BlockSpec((kkC, 1), lambda n, h: (0, 0),
                         pipeline_mode=pl.Buffered(1)),
        ],
        out_specs=pl.BlockSpec((1, kkC, Ms), lambda n, h: (n, 0, h)),
        compiler_params=pltpu.CompilerParams(
            dimension_semantics=("parallel", "parallel"),
            vmem_limit_bytes=vmem_limit),
        cost_estimate=cost,
    )(x_flat, w_packed, b_packed)

    # ---- untangle taps -> upsampled grid + NCHW (one fused XLA transpose) ---
    y = y.reshape(N, k, k, Cout, H, W)             # (n, ky, kx, co, i, j)
    out = jnp.transpose(y, (0, 3, 4, 1, 5, 2))     # (n, co, i, ky, j, kx)
    return out.reshape(N, Cout, Ho, Wo)


# ----------------------------------------------------------------------------
# Independent pure-JAX reference: fractionally-strided convolution
# (dilate input by `stride`, pad by k-1, convolve with the spatially flipped
#  kernel with in/out channels swapped).
# ----------------------------------------------------------------------------
def reference_conv_transpose2d(x, weight, bias, stride):
    Cin, Cout, kh, kw = weight.shape
    w_oihw = jnp.transpose(weight, (1, 0, 2, 3))[:, :, ::-1, ::-1]
    y = lax.conv_general_dilated(
        x, w_oihw,
        window_strides=(1, 1),
        padding=[(kh - 1, kh - 1), (kw - 1, kw - 1)],
        lhs_dilation=(stride, stride),
        dimension_numbers=("NCHW", "OIHW", "NCHW"),
        precision=lax.Precision.HIGHEST)
    return y + bias[None, :, None, None]


if __name__ == "__main__":
    # Upsample(input_dim=4, output_dim=8, kernel=2, stride=2) at small shapes.
    N, Cin, Cout, H, W = 2, 4, 8, 16, 16
    kernel_size, stride = 2, 2

    key = jax.random.PRNGKey(0)
    kx_, kw_, kb_ = jax.random.split(key, 3)
    x = jax.random.normal(kx_, (N, Cin, H, W), jnp.float32)
    weight = 0.1 * jax.random.normal(
        kw_, (Cin, Cout, kernel_size, kernel_size), jnp.float32)
    bias = 0.05 * jax.random.normal(kb_, (Cout,), jnp.float32)

    out = conv_transpose2d(x, weight, bias, stride=stride)
    jax.block_until_ready(out)

    ref = reference_conv_transpose2d(x, weight, bias, stride)
    Ho = (H - 1) * stride + kernel_size
    Wo = (W - 1) * stride + kernel_size
    assert out.shape == (N, Cout, Ho, Wo)
    assert out.dtype == x.dtype
    # bf16 MXU operands (f32 accumulate) vs. a full-f32 reference.
    assert jnp.allclose(out, ref, atol=3e-2, rtol=3e-2)

    print("KERNEL_OK")
</pallas_src>

<mosaic_0001>
module attributes {stable_mosaic.version = 11 : i64} {
  func.func @_deconv_kernel(%arg0: i32, %arg1: i32, %arg2: memref<1x4x256xbf16, #tpu.memory_space<vmem>>, %arg3: memref<32x4xbf16, #tpu.memory_space<vmem>>, %arg4: memref<32x1xf32, #tpu.memory_space<vmem>>, %arg5: memref<1x32x256xf32, #tpu.memory_space<vmem>>) attributes {dimension_semantics = [#tpu.dimension_semantics<parallel>, #tpu.dimension_semantics<parallel>], iteration_bounds = array<i64: 2, 1>, scalar_prefetch = 0 : i64, scratch_operands = 0 : i64, tpu.core_type = #tpu.core_type<tc>, window_params = [{transform_indices = @transform_0, window_bounds = array<i64: 1, 4, 256>}, {pipeline_mode = #tpu.pipeline_mode<synchronous>, transform_indices = @transform_1, window_bounds = array<i64: 32, 4>}, {pipeline_mode = #tpu.pipeline_mode<synchronous>, transform_indices = @transform_2, window_bounds = array<i64: 32, 1>}, {transform_indices = @transform_3, window_bounds = array<i64: 1, 32, 256>}]} {
    %c0 = arith.constant 0 : index
    %c0_0 = arith.constant 0 : index
    %0 = vector.load %arg3[%c0, %c0_0] : memref<32x4xbf16, #tpu.memory_space<vmem>>, vector<32x4xbf16>
    %c0_1 = arith.constant 0 : index
    %c0_2 = arith.constant 0 : index
    %c0_3 = arith.constant 0 : index
    %1 = vector.load %arg2[%c0_1, %c0_2, %c0_3] : memref<1x4x256xbf16, #tpu.memory_space<vmem>>, vector<1x4x256xbf16>
    %2 = vector.shape_cast %1 : vector<1x4x256xbf16> to vector<4x256xbf16>
    %cst = arith.constant dense<0.000000e+00> : vector<32x256xf32>
    %3 = tpu.matmul %0, %2, %cst {dimension_numbers = #tpu.dot_dimension_numbers<[1], [0], [0], [1], [0, 0, 1, 1], [], []>} : vector<32x4xbf16>, vector<4x256xbf16>, vector<32x256xf32> -> vector<32x256xf32>
    %c0_4 = arith.constant 0 : index
    %c0_5 = arith.constant 0 : index
    %4 = vector.load %arg4[%c0_4, %c0_5] : memref<32x1xf32, #tpu.memory_space<vmem>>, vector<32x1xf32>
    %5 = vector.broadcast %4 : vector<32x1xf32> to vector<32x256xf32>
    %6 = arith.addf %3, %5 : vector<32x256xf32>
    %c0_6 = arith.constant 0 : index
    %c0_7 = arith.constant 0 : index
    %c0_8 = arith.constant 0 : index
    %7 = vector.load %arg5[%c0_6, %c0_7, %c0_8] : memref<1x32x256xf32, #tpu.memory_space<vmem>>, vector<1x32x256xf32>
    %8 = vector.shape_cast %7 : vector<1x32x256xf32> to vector<32x256xf32>
    %9 = vector.shape_cast %6 : vector<32x256xf32> to vector<1x32x256xf32>
    tpu.vector_store %arg5[%c0_6, %c0_7, %c0_8], %9 {strides = array<i32>} : memref<1x32x256xf32, #tpu.memory_space<vmem>>, vector<1x32x256xf32>,
    return
  }
  func.func @transform_0(%arg0: i32, %arg1: i32) -> (i32, i32, i32) {
    %c0_i32 = arith.constant 0 : i32
    %c0_i32_0 = arith.constant 0 : i32
    return %arg0, %c0_i32, %arg1 : i32, i32, i32
  }
  func.func @transform_1(%arg0: i32, %arg1: i32) -> (i32, i32) {
    %c0_i32 = arith.constant 0 : i32
    %c0_i32_0 = arith.constant 0 : i32
    %c0_i32_1 = arith.constant 0 : i32
    return %c0_i32, %c0_i32_0 : i32, i32
  }
  func.func @transform_2(%arg0: i32, %arg1: i32) -> (i32, i32) {
    %c0_i32 = arith.constant 0 : i32
    %c0_i32_0 = arith.constant 0 : i32
    %c0_i32_1 = arith.constant 0 : i32
    return %c0_i32, %c0_i32_0 : i32, i32
  }
  func.func @transform_3(%arg0: i32, %arg1: i32) -> (i32, i32, i32) {
    %c0_i32 = arith.constant 0 : i32
    %c0_i32_0 = arith.constant 0 : i32
    return %arg0, %c0_i32, %arg1 : i32, i32, i32
  }
}

</mosaic_0001>

<llo_original>
// kernel: tile.0
$region0: #{tile.0}
  %s0 = inlined_call_operand.vmem [shape: f32[4,8], index: 0, kind: input, shape index: {}]
  %s1 = inlined_call_operand.vmem [shape: f32[32,1], index: 1, kind: output, shape index: {}]
  $region1: #{tile.0} parent=0
    #allocation0 [shape = 'u8[4096]{0}', space=vmem, size = 0x1000, scoped, tag = 'scoped mem for input reshape']
    %s3 = sshll.u32 1, 4
    %s4 = ssub.s32 %s3, 1
    %v5 = vld [vmem:[%s0] sm:%s4]
    %6 = vst [vmem:[#allocation0] sm:%s4] %v5
    %v7 = vld [vmem:[#allocation0] sm:$0xf]
    %vm8 = vcmask 7168
    %9 = vst.msk [vmem:[%s1] ss:$8 sm:$0xf] %vm8, %v7
    %v10 = vld [vmem:[#allocation0] sm:$0xf]
    %11 = vrot.lane.b32.xlu0 %v10, 127
    %v12 = vpop.permute.xlu0 %11
    %vm13 = vcmask 7168
    %s14 = scalar_lea.vmem %s1, 1
    %15 = vst.msk [vmem:[%s14] ss:$8 sm:$0xf] %vm13, %v12
    %v16 = vld [vmem:[#allocation0] sm:$0xf]
    %17 = vrot.lane.b32.xlu0 %v16, 126
    %v18 = vpop.permute.xlu0 %17
    %vm19 = vcmask 7168
    %s20 = scalar_lea.vmem %s1, 2
    %21 = vst.msk [vmem:[%s20] ss:$8 sm:$0xf] %vm19, %v18
    %v22 = vld [vmem:[#allocation0] sm:$0xf]
    %23 = vrot.lane.b32.xlu0 %v22, 125
    %v24 = vpop.permute.xlu0 %23
    %vm25 = vcmask 7168
    %s26 = scalar_lea.vmem %s1, 3
    %27 = vst.msk [vmem:[%s26] ss:$8 sm:$0xf] %vm25, %v24
    %v28 = vld [vmem:[#allocation0] sm:$0xf]
    %29 = vrot.lane.b32.xlu0 %v28, 124
    %v30 = vpop.permute.xlu0 %29
    %vm31 = vcmask 7168
    %s32 = scalar_lea.vmem %s1, 4
    %33 = vst.msk [vmem:[%s32] ss:$8 sm:$0xf] %vm31, %v30
    %v34 = vld [vmem:[#allocation0] sm:$0xf]
    %35 = vrot.lane.b32.xlu0 %v34, 123
    %v36 = vpop.permute.xlu0 %35
    %vm37 = vcmask 7168
    %s38 = scalar_lea.vmem %s1, 5
    %39 = vst.msk [vmem:[%s38] ss:$8 sm:$0xf] %vm37, %v36
    %v40 = vld [vmem:[#allocation0] sm:$0xf]
    %41 = vrot.lane.b32.xlu0 %v40, 122
    %v42 = vpop.permute.xlu0 %41
    %vm43 = vcmask 7168
    %s44 = scalar_lea.vmem %s1, 6
    %45 = vst.msk [vmem:[%s44] ss:$8 sm:$0xf] %vm43, %v42
    %v46 = vld [vmem:[#allocation0] sm:$0xf]
    %47 = vrot.lane.b32.xlu0 %v46, 121
    %v48 = vpop.permute.xlu0 %47
    %vm49 = vcmask 7168
    %s50 = scalar_lea.vmem %s1, 7
    %51 = vst.msk [vmem:[%s50] ss:$8 sm:$0xf] %vm49, %v48

// kernel: tile.8
$region0: #{tile.8}
  #allocation0 [shape = 's32[1]{0}', space=sflag, size = 0x4, scoped, tag = 'scoped memory for tile.8']
  %s0 = inlined_call_operand.vmem [shape: f32[8], index: 0, kind: input, shape index: {}]
  %s1 = inlined_call_operand.vmem [shape: f32[4,8], index: 1, kind: output, shape index: {}]
  // Predicated region
  $region2: #{tile.8} parent=0 // pred_check
    _
  $region3: #{tile.8} parent=0 // pred_check_branch
    %3 = sbr.rel (0) target = $region5
  $region4: #{tile.8} parent=0 // pred_region
    _
  $region5: #{tile.8} parent=0 // pred_fallthru
    _
  %v4 = vld [vmem:[%s0] ss:$0 sm:$0xff]
  %5 = vst [vmem:[%s1] sm:$0xf] %v4

// kernel: conv_transpose2d.1
$region0: #{conv_transpose2d.1}
  #allocation0 [shape = 'u32[]', space=smem, size = 0x4, offset = 0x4, fixed_abs, tag = 'smem constant byte address 0x4 - core index']
  #allocation1 [shape = 'u32[144,128]{1,0:T(1,128)}', space=vmem, size = 0x12000, scoped, tag = 'internal scratch']
  %s0 = inlined_call_operand.vmem [shape: bf16[2,4,256], index: 0, kind: input, shape index: {}]
  %s1 = inlined_call_operand.vmem [shape: bf16[32,4], index: 1, kind: input, shape index: {}]
  %s2 = inlined_call_operand.vmem [shape: f32[32,1], index: 2, kind: input, shape index: {}]
  %s3 = inlined_call_operand.vmem [shape: f32[2,32,256], index: 3, kind: output, shape index: {}]
  %s4 = sld [smem:[#allocation0]]
  $region45: #{conv_transpose2d.1} parent=0
    _
  %s6 = ssub.s32 1, %s4
  %s7 = scalar_select 0, %s6, %s4
  loop: start=0, step=1, limit=4
  $region2: #{conv_transpose2d.1} parent=0 // loop_pre_header
    _
  $region3: #{conv_transpose2d.1} parent=0 // loop_header
    %s9 = sphi 0, %s13
    %p10 = scmp.ge.s32.totalorder %s9, 4
    %s16 = sphi 0, %s28
    %s17 = sphi 0, %s24
    %s18 = sphi 0, %s16
    %s19 = sphi 0, %s17
    %s20 = sphi 0, %s18
    %s21 = sphi 0, %s19
    %s33 = sphi 0, %s35
    %s36 = sphi 0, %s33
    %s37 = sphi 0, %s36
    %s53 = sphi 0, %s37
    %s57 = sphi 0, %s57
    %s59 = sphi 0, %s57
    %s60 = sphi 0, %s59
    %s74 = sphi 0, %s60
    %s78 = sphi 0, %s78
    %s80 = sphi 0, %s78
    %s81 = sphi 0, %s80
    %s95 = sphi 0, %s81
    %s103 = sphi 0, %s105
    %s106 = sphi 0, %s103
    %s107 = sphi 0, %s106
    %s123 = sphi 0, %s107
  $region4: #{conv_transpose2d.1} parent=0 // loop_header_branch
    %12 = sbr.rel (%p10) target = $region8
  $region5: #{conv_transpose2d.1} parent=0 // loop_body
    %s14 = ssub.s32 %s9, 1
    %s15 = ssub.s32 %s9, 2
    %s22 = sadd.s32 1, %s17
    %p23 = scmp.ge.s32.totalorder %s22, 1
    %s24 = scalar_select %p23, 0, %s22
    %s25 = sadd.s32 1, %s16
    %s26 = scalar_select %p23, %s25, %s16
    %p27 = scmp.ge.s32.totalorder %s26, 2
    %s28 = scalar_select %p27, 0, %s26
    %s29 = ssub.s32 %s16, %s28
    %s30 = ssub.s32 %s17, %s24
    %s31 = sor.u32 %s29, %s30
    %p32 = scmp.eq.s32.totalorder %s31, 0
    %s34 = sadd.s32 %s33, 1
    %s35 = scalar_select %p32, %s33, %s34
    %p38 = pneg %p32
    %p39 = scmp.eq.s32.totalorder %s9, 1
    %p40 = por %p38, %p39
    %p41 = scmp.ne.s32.totalorder %s33, %s36
    %p42 = scmp.eq.s32.totalorder %s9, 0
    %p43 = por %p41, %p42
    %p44 = scmp.ne.s32.totalorder %s33, %s36
    %p45 = scmp.eq.s32.totalorder %s14, 1
    %p46 = por %p44, %p45
    %p47 = scmp.ne.s32.totalorder %s36, %s37
    %p48 = scmp.eq.s32.totalorder %s14, 0
    %p49 = por %p47, %p48
    %p50 = scmp.ne.s32.totalorder %s36, %s37
    %p51 = scmp.eq.s32.totalorder %s15, 1
    %p52 = por %p50, %p51
    %p54 = scmp.ne.s32.totalorder %s37, %s53
    %p55 = scmp.eq.s32.totalorder %s15, 0
    %p56 = por %p54, %p55
    %s58 = sadd.s32 %s57, 1
    %p61 = scmp.eq.s32.totalorder %s9, 1
    %p62 = scmp.ne.s32.totalorder %s57, %s59
    %p63 = scmp.eq.s32.totalorder %s9, 0
    %p64 = por %p62, %p63
    %p65 = scmp.ne.s32.totalorder %s57, %s59
    %p66 = scmp.eq.s32.totalorder %s14, 1
    %p67 = por %p65, %p66
    %p68 = scmp.ne.s32.totalorder %s59, %s60
    %p69 = scmp.eq.s32.totalorder %s14, 0
    %p70 = por %p68, %p69
    %p71 = scmp.ne.s32.totalorder %s59, %s60
    %p72 = scmp.eq.s32.totalorder %s15, 1
    %p73 = por %p71, %p72
    %p75 = scmp.ne.s32.totalorder %s60, %s74
    %p76 = scmp.eq.s32.totalorder %s15, 0
    %p77 = por %p75, %p76
    %s79 = sadd.s32 %s78, 1
    %p82 = scmp.eq.s32.totalorder %s9, 1
    %p83 = scmp.ne.s32.totalorder %s78, %s80
    %p84 = scmp.eq.s32.totalorder %s9, 0
    %p85 = por %p83, %p84
    %p86 = scmp.ne.s32.totalorder %s78, %s80
    %p87 = scmp.eq.s32.totalorder %s14, 1
    %p88 = por %p86, %p87
    %p89 = scmp.ne.s32.totalorder %s80, %s81
    %p90 = scmp.eq.s32.totalorder %s14, 0
    %p91 = por %p89, %p90
    %p92 = scmp.ne.s32.totalorder %s80, %s81
    %p93 = scmp.eq.s32.totalorder %s15, 1
    %p94 = por %p92, %p93
    %p96 = scmp.ne.s32.totalorder %s81, %s95
    %p97 = scmp.eq.s32.totalorder %s15, 0
    %p98 = por %p96, %p97
    %s99 = ssub.s32 %s16, %s28
    %s100 = ssub.s32 %s17, %s24
    %s101 = sor.u32 %s99, %s100
    %p102 = scmp.eq.s32.totalorder %s101, 0
    %s104 = sadd.s32 %s103, 1
    %s105 = scalar_select %p102, %s103, %s104
    %p108 = pneg %p102
    %p109 = scmp.eq.s32.totalorder %s9, 1
    %p110 = por %p108, %p109
    %p111 = scmp.ne.s32.totalorder %s103, %s106
    %p112 = scmp.eq.s32.totalorder %s9, 0
    %p113 = por %p111, %p112
    %p114 = scmp.ne.s32.totalorder %s103, %s106
    %p115 = scmp.eq.s32.totalorder %s14, 1
    %p116 = por %p114, %p115
    %p117 = scmp.ne.s32.totalorder %s106, %s107
    %p118 = scmp.eq.s32.totalorder %s14, 0
    %p119 = por %p117, %p118
    %p120 = scmp.ne.s32.totalorder %s106, %s107
    %p121 = scmp.eq.s32.totalorder %s15, 1
    %p122 = por %p120, %p121
    %p124 = scmp.ne.s32.totalorder %s107, %s123
    %p125 = scmp.eq.s32.totalorder %s15, 0
    %p126 = por %p124, %p125
    %p127 = scmp.le.s32.totalorder 1, %s9
    %p128 = scmp.lt.s32.totalorder %s9, 3
    %p129 = pnand %p127, %p128
    %p130 = pneg %p129
    // Predicated region
    $region9: #{conv_transpose2d.1} parent=5 // pred_check
      _
    $region10: #{conv_transpose2d.1} parent=5 // pred_check_branch
      %132 = sbr.rel (%p129) target = $region12
    $region11: #{conv_transpose2d.1} parent=5 // pred_region
      %s133 = ssub.s32 %s9, 1
      // Predicated region
      $region13: #{conv_transpose2d.1} parent=11 // pred_check
        %p134 = pneg %p70
      $region14: #{conv_transpose2d.1} parent=11 // pred_check_branch
        %136 = sbr.rel (%p134) target = $region16
      $region15: #{conv_transpose2d.1} parent=11 // pred_region
        _
      $region16: #{conv_transpose2d.1} parent=11 // pred_fallthru
        _
      // Predicated region
      $region17: #{conv_transpose2d.1} parent=11 // pred_check
        %p137 = pneg %p91
      $region18: #{conv_transpose2d.1} parent=11 // pred_check_branch
        %139 = sbr.rel (%p137) target = $region20
      $region19: #{conv_transpose2d.1} parent=11 // pred_region
        _
      $region20: #{conv_transpose2d.1} parent=11 // pred_fallthru
        _
    $region12: #{conv_transpose2d.1} parent=5 // pred_fallthru
      _
    %p140 = scmp.lt.s32.totalorder %s9, 2
    // Predicated region
    $region21: #{conv_transpose2d.1} parent=5 // pred_check
      %p141 = pneg %p140
    $region22: #{conv_transpose2d.1} parent=5 // pred_check_branch
      %143 = sbr.rel (%p141) target = $region24
    $region23: #{conv_transpose2d.1} parent=5 // pred_region
      // Predicated region
      $region25: #{conv_transpose2d.1} parent=23 // pred_check
        %p144 = pneg %p43
      $region26: #{conv_transpose2d.1} parent=23 // pred_check_branch
        %146 = sbr.rel (%p144) target = $region28
      $region27: #{conv_transpose2d.1} parent=23 // pred_region
        %s147 = smul.u32 2, %s17
        %p148 = scmp.lt.s32.totalorder %s16, 1
        %s149 = scalar_select %p148, %s16, 1
        %p150 = scmp.lt.s32.totalorder %s147, 1
        %s151 = scalar_select %p150, %s147, 1
        %s152 = smul.addr %s149, 2
        %s153 = sadd.s32 %s151, %s152
        %s154 = smul.addr %s153, 2
        %s155 = scalar_lea.vmem %s0, %s154
        %s156 = smul.u32 2, %s17
      $region28: #{conv_transpose2d.1} parent=23 // pred_fallthru
        _
    $region24: #{conv_transpose2d.1} parent=5 // pred_fallthru
      _
    %p157 = scmp.le.s32.totalorder 1, %s9
    %p158 = scmp.lt.s32.totalorder %s9, 3
    %p159 = pnand %p157, %p158
    %p160 = pneg %p159
    // Predicated region
    $region29: #{conv_transpose2d.1} parent=5 // pred_check
      _
    $region30: #{conv_transpose2d.1} parent=5 // pred_check_branch
      %162 = sbr.rel (%p159) target = $region32
    $region31: #{conv_transpose2d.1} parent=5 // pred_region
      %s163 = ssub.s32 %s9, 1
      %s164 = smul.u32 2, %s19
      %p165 = scmp.lt.s32.totalorder %s18, 1
      %s166 = scalar_select %p165, %s18, 1
      %p167 = scmp.lt.s32.totalorder %s164, 1
      %s168 = scalar_select %p167, %s164, 1
      %s169 = smul.addr %s166, 2
      %s170 = sadd.s32 %s168, %s169
      %s171 = smul.addr %s170, 2
      %s172 = scalar_lea.vmem %s0, %s171
      %p173 = pneg %p49
      %p174 = pneg %p46
      %p175 = pneg %p70
      %p176 = pneg %p67
      %p177 = pneg %p91
      %p178 = pneg %p88
      %p179 = pneg %p119
      %p180 = pneg %p116
      %s181 = smul.u32 2, %s19
      %p182 = scmp.lt.s32.totalorder %s18, 1
      %s183 = scalar_select %p182, %s18, 1
      %p184 = scmp.lt.s32.totalorder %s181, 1
      %s185 = scalar_select %p184, %s181, 1
      %s186 = smul.addr %s183, 8
      %s187 = sadd.s32 %s185, %s186
      %s188 = smul.addr %s187, 8
      %s189 = scalar_lea.vmem %s3, %s188
      %s190 = smul.u32 2, %s19
      %p191 = scmp.lt.s32.totalorder %s18, 1
      %s192 = scalar_select %p191, %s18, 1
      %p193 = scmp.lt.s32.totalorder %s190, 1
      %s194 = scalar_select %p193, %s190, 1
      %s195 = smul.addr %s192, 2
      %s196 = sadd.s32 %s194, %s195
      %s197 = smul.addr %s196, 2
      %s198 = scalar_lea.vmem %s0, %s197
      %s199 = smul.u32 2, %s19
      %s200 = smul.u32 2, %s19
      %p201 = scmp.lt.s32.totalorder %s18, 1
      %s202 = scalar_select %p201, %s18, 1
      %p203 = scmp.lt.s32.totalorder %s200, 1
      %s204 = scalar_select %p203, %s200, 1
      %s205 = smul.addr %s202, 8
      %s206 = sadd.s32 %s204, %s205
      %s207 = smul.addr %s206, 8
      %s208 = scalar_lea.vmem %s3, %s207
      %s209 = smul.u32 2, %s19
      %v211 = vld [vmem:[%s1] sm:$0xf]
      %v212 = vld [vmem:[%s1 + $0x4] sm:$0xf]
      %v213 = vld [vmem:[%s1 + $0x8] sm:$0xf]
      %v214 = vld [vmem:[%s1 + $0xc] sm:$0xf]
      %v215 = vld [vmem:[%s198] sm:$0xf]
      %v216 = vld [vmem:[%s2] sm:$0xff]
      %v217 = vld [vmem:[%s2 + $0x8] sm:$0xff]
      %v218 = vld [vmem:[%s2 + $0x10] sm:$0xff]
      %v219 = vld [vmem:[%s2 + $0x18] sm:$0xff]
      %221 = vset.pattern.permute.xlu0 0
      %222 = vperm.xlu0 %221, %v216
      %v223 = vpop.permute.xlu0 %222
      %226 = vset.pattern.permute.xlu0 0
      %227 = vperm.xlu0 %226, %v217
      %v228 = vpop.permute.xlu0 %227
      %231 = vset.pattern.permute.xlu0 0
      %232 = vperm.xlu0 %231, %v218
      %v233 = vpop.permute.xlu0 %232
      %236 = vset.pattern.permute.xlu0 0
      %237 = vperm.xlu0 %236, %v219
      %v238 = vpop.permute.xlu0 %237
      %v244 = vunpack.c.l.b16 %v211
      %v245 = vunpack.c.l.b16 %v212
      %v246 = vunpack.c.l.b16 %v213
      %v247 = vunpack.c.l.b16 %v214
      %v248 = vpack.c.b16 %v245, %v244
      %v249 = vpack.c.b16 %v247, %v246
      %v252 = vunpack.c.l.s4 1983009808
      %v253 = vunpack.c.0.s8 %v252
      %v254 = vlaneseq
      %v255 = vshrl.u32 %v254, 7
      %v256 = vsub.s32 %v253, %v255
      %v257 = vrot.slane %v215, %v256
      %v258 = vcombine.high %v257, %v257
      %vm259 = vcmask 31744
      %v261 = vsel %vm259, %v248, 0
      %v264 = vsel %vm259, %v249, 0
      %vm266 = vcmask 1041408
      %v268 = vsel %vm266, %v257, 0
      %v271 = vsel %vm266, %v258, 0
      %273 = vmatprep.subr.bf16.mxu0 0
      %274 = vmatpush1.bf16.msra.mxu0 0
      %275 = vmatprep.subr.bf16.mxu0 0
      %276 = vmatpush1.bf16.msra.mxu0 0
      %277 = vmatprep.subr.bf16.mxu0 0
      %278 = vmatpush1.bf16.msra.mxu0 0
      %279 = vmatprep.subr.bf16.mxu0 0
      %280 = vmatpush1.bf16.msra.mxu0 0
      %281 = vmatprep.subr.bf16.mxu0 0
      %282 = vmatpush1.bf16.msra.mxu0 0
      %283 = vmatprep.subr.bf16.mxu0 0
      %284 = vmatpush1.bf16.msra.mxu0 0
      %285 = vmatprep.subr.bf16.mxu0 0
      %286 = vmatpush1.bf16.msra.mxu0 0
      %287 = vmatprep.subr.bf16.mxu0 %v271
      %288 = vmatpush1.bf16.msra.mxu0 %v268
      %289 = vmatprep.subr.bf16.mxu0 0
      %290 = vmatpush2.bf16.msra.mxu0 0
      %291 = vmatprep.subr.bf16.mxu0 0
      %292 = vmatpush2.bf16.msra.mxu0 0
      %293 = vmatprep.subr.bf16.mxu0 0
      %294 = vmatpush2.bf16.msra.mxu0 0
      %295 = vmatprep.subr.bf16.mxu0 0
      %296 = vmatpush2.bf16.msra.mxu0 0
      %297 = vmatprep.subr.bf16.mxu0 0
      %298 = vmatpush2.bf16.msra.mxu0 0
      %299 = vmatprep.subr.bf16.mxu0 0
      %300 = vmatpush2.bf16.msra.mxu0 0
      %301 = vmatprep.subr.bf16.mxu0 0
      %302 = vmatpush2.bf16.msra.mxu0 0
      %303 = vmatprep.subr.bf16.mxu0 0
      %304 = vmatpush2.bf16.msra.mxu0 0
      %305 = vmatprep.mubr.bf16.mxu0 0
      %306 = vmatmul.mubr.bf16.gmra.mxu0 %v261
      %v307 = vpop.f32.mrf.mxu0
      %v308 = vadd.f32 %v223, %v307
      %v309 = vpop.f32.mrf.mxu0
      %v310 = vadd.f32 %v223, %v309
      %v311 = vpop.f32.mrf.mxu0
      %v312 = vadd.f32 %v228, %v311
      %v313 = vpop.f32.mrf.mxu0
      %v314 = vadd.f32 %v228, %v313
      %315 = vmatprep.mubr.bf16.mxu0 0
      %316 = vmatmul.mubr.bf16.gmra.mxu0 %v264
      %v317 = vpop.f32.mrf.mxu0
      %v318 = vadd.f32 %v233, %v317
      %v319 = vpop.f32.mrf.mxu0
      %v320 = vadd.f32 %v233, %v319
      %v321 = vpop.f32.mrf.mxu0
      %v322 = vadd.f32 %v238, %v321
      %v323 = vpop.f32.mrf.mxu0
      %v324 = vadd.f32 %v238, %v323
      %325 = vdwg.mxu0
      %326 = vst [vmem:[%s208] sm:$0xff] %v308
      %327 = vst [vmem:[%s208 + $0x8] sm:$0xff] %v310
      %328 = vst [vmem:[%s208 + $0x10] sm:$0xff] %v312
      %329 = vst [vmem:[%s208 + $0x18] sm:$0xff] %v314
      %330 = vst [vmem:[%s208 + $0x20] sm:$0xff] %v318
      %331 = vst [vmem:[%s208 + $0x28] sm:$0xff] %v320
      %332 = vst [vmem:[%s208 + $0x30] sm:$0xff] %v322
      %333 = vst [vmem:[%s208 + $0x38] sm:$0xff] %v324
      %s334 = smul.u32 2, %s19
      %p335 = scmp.lt.s32.totalorder %s18, 1
      %s336 = scalar_select %p335, %s18, 1
      %p337 = scmp.lt.s32.totalorder %s334, 1
      %s338 = scalar_select %p337, %s334, 1
      %s339 = smul.addr %s336, 8
      %s340 = sadd.s32 %s338, %s339
      %s341 = smul.addr %s340, 8
      %s342 = scalar_lea.vmem %s3, %s341
      // Predicated region
      $region33: #{conv_transpose2d.1} parent=31 // pred_check
        %p343 = pneg %p116
      $region34: #{conv_transpose2d.1} parent=31 // pred_check_branch
        %345 = sbr.rel (%p343) target = $region36
      $region35: #{conv_transpose2d.1} parent=31 // pred_region
        %s346 = smul.u32 2, %s19
      $region36: #{conv_transpose2d.1} parent=31 // pred_fallthru
        _
    $region32: #{conv_transpose2d.1} parent=5 // pred_fallthru
      _
    %p347 = scmp.le.s32.totalorder 2, %s9
    // Predicated region
    $region37: #{conv_transpose2d.1} parent=5 // pred_check
      %p348 = pneg %p347
    $region38: #{conv_transpose2d.1} parent=5 // pred_check_branch
      %350 = sbr.rel (%p348) target = $region40
    $region39: #{conv_transpose2d.1} parent=5 // pred_region
      %s351 = ssub.s32 %s9, 2
      // Predicated region
      $region41: #{conv_transpose2d.1} parent=39 // pred_check
        %p352 = pneg %p122
      $region42: #{conv_transpose2d.1} parent=39 // pred_check_branch
        %354 = sbr.rel (%p352) target = $region44
      $region43: #{conv_transpose2d.1} parent=39 // pred_region
        %s355 = smul.u32 2, %s21
        %p356 = scmp.lt.s32.totalorder %s20, 1
        %s357 = scalar_select %p356, %s20, 1
        %p358 = scmp.lt.s32.totalorder %s355, 1
        %s359 = scalar_select %p358, %s355, 1
        %s360 = smul.addr %s357, 8
        %s361 = sadd.s32 %s359, %s360
        %s362 = smul.addr %s361, 8
        %s363 = scalar_lea.vmem %s3, %s362
      $region44: #{conv_transpose2d.1} parent=39 // pred_fallthru
        _
    $region40: #{conv_transpose2d.1} parent=5 // pred_fallthru
      _
  $region6: #{conv_transpose2d.1} parent=0 // loop_footer
    %s13 = sadd.s32 1, %s9
  $region7: #{conv_transpose2d.1} parent=0 // loop_footer_branch
    %8 = sbr.rel target = $region3
  $region8: #{conv_transpose2d.1} parent=0 // loop_exit
    _

</llo_original>
